<compile_context>
chip_gen: v5e
topology: v5e:2x2
jax: 0.10.0
libtpu: 0.0.40
codegen_flags: <defaults>
</compile_context>

<pallas_src>
import jax
import jax.numpy as jnp
from jax.experimental import pallas as pl
from jax.experimental.pallas import tpu as pltpu


def _normalize_kernel(mean_ref, inv_ref, x_ref, o_ref):
    # mean/inv are (row_tile, 1) f32 columns, broadcast across the lane axis.
    # Compute in f32, cast only on the store (identity cast for f32 inputs).
    x = x_ref[...].astype(jnp.float32)
    o_ref[...] = ((x - mean_ref[...]) * inv_ref[...]).astype(o_ref.dtype)


def _sublane_multiple(dtype):
    # Native sublane tile height: 8 rows (32-bit), 16 (16-bit), 32 (8-bit).
    itemsize = jnp.dtype(dtype).itemsize
    return {4: 8, 2: 16, 1: 32}.get(itemsize, 8)


def _round_up(x, m):
    return ((x + m - 1) // m) * m


def _pick_tiles(rows, cols, itemsize, sublane, max_tile_bytes):
    # Lane axis: whole rows if a full row fits the byte budget; else a large
    # multiple-of-128 lane tile.
    if cols * itemsize <= max_tile_bytes:
        lane_tile = cols
    else:
        lane_tile = max(128, (max_tile_bytes // (sublane * itemsize)) // 128 * 128)

    # Row axis: as many rows as the budget allows, at dtype-aware sublane granularity.
    row_cap = max(sublane, (max_tile_bytes // (lane_tile * itemsize)) // sublane * sublane)
    if rows <= sublane:
        row_tile = rows  # full-dim block: always legal
    else:
        row_tile = min(row_cap, _round_up(rows, sublane))
        # Megacore (v7x: 2 TCs/chip): ensure the parallel row axis has >= 2 blocks
        # whenever the row count allows it, instead of a single degenerate block.
        if pl.cdiv(rows, row_tile) < 2:
            half = _round_up(pl.cdiv(rows, 2), sublane)
            if half < rows:
                row_tile = half
    return row_tile, lane_tile


def normalize(x, mean, std, *, max_tile_bytes=4 << 20, min_pallas_bytes=256 << 10):
    """x: (N, C, H, W); mean/std: (C,) per-channel statistics."""
    N, C, H, W = x.shape
    rows, cols = N * C, H * W
    itemsize = x.dtype.itemsize

    mean_f32 = mean.astype(jnp.float32)
    # TODO(synk): no guard for std == 0 (matches PyTorch semantics: silent inf/nan).
    inv_f32 = 1.0 / std.astype(jnp.float32)

    # Small-input bypass: the fixed pallas_call/grid-step overhead dwarfs tiny
    # workloads; XLA's fused elementwise op is strictly faster there.
    if x.size * itemsize < min_pallas_bytes:
        y = (x.astype(jnp.float32) - mean_f32.reshape(1, C, 1, 1)) * inv_f32.reshape(1, C, 1, 1)
        return y.astype(x.dtype)

    # Free reshape: each (H, W) channel plane is contiguous in NCHW.
    x2 = x.reshape(rows, cols)
    mean_col = jnp.tile(mean_f32, N).reshape(rows, 1)
    inv_col = jnp.tile(inv_f32, N).reshape(rows, 1)

    sublane = _sublane_multiple(x.dtype)
    row_tile, lane_tile = _pick_tiles(rows, cols, itemsize, sublane, max_tile_bytes)

    row_blocks = pl.cdiv(rows, row_tile)
    lane_blocks = pl.cdiv(cols, lane_tile)

    if lane_blocks == 1:
        # Whole-row tiles: 1-D grid, fully contiguous DMAs, single parallel axis.
        grid = (row_blocks,)
        col_spec = pl.BlockSpec((row_tile, 1), lambda i: (i, 0))
        x_spec = pl.BlockSpec((row_tile, lane_tile), lambda i: (i, 0))
        dims = ("parallel",)
    else:
        grid = (row_blocks, lane_blocks)
        col_spec = pl.BlockSpec((row_tile, 1), lambda i, j: (i, 0))
        x_spec = pl.BlockSpec((row_tile, lane_tile), lambda i, j: (i, j))
        dims = ("parallel", "parallel")

    # Explicit scoped-VMEM budget: double-buffered input + output tiles plus the
    # (lane-padded) f32 stat columns, with headroom; capped under v7x's 64 MiB.
    tile_bytes = row_tile * lane_tile * itemsize
    col_bytes = row_tile * 128 * 4
    footprint = 2 * (2 * tile_bytes + 2 * col_bytes)
    vmem_limit = int(min(max(footprint + (4 << 20), 16 << 20), 56 << 20))

    out2 = pl.pallas_call(
        _normalize_kernel,
        out_shape=jax.ShapeDtypeStruct((rows, cols), x.dtype),
        grid=grid,
        in_specs=[col_spec, col_spec, x_spec],
        out_specs=x_spec,
        compiler_params=pltpu.CompilerParams(
            dimension_semantics=dims,
            vmem_limit_bytes=vmem_limit,
        ),
        cost_estimate=pl.CostEstimate(
            flops=2 * x.size,
            transcendentals=0,
            bytes_accessed=2 * x.size * itemsize,
        ),
    )(mean_col, inv_col, x2)

    return out2.reshape(N, C, H, W)


if __name__ == "__main__":
    # Deterministic "parameters" (CIFAR-10 per-channel statistics), as the PyTorch
    # module would hold after __init__ — no checkpoint loading.
    mean = jnp.asarray([0.4914, 0.4822, 0.4465], dtype=jnp.float32)
    std = jnp.asarray([0.2470, 0.2435, 0.2616], dtype=jnp.float32)

    def ref(x):
        return (x - mean.reshape(1, -1, 1, 1)) / std.reshape(1, -1, 1, 1)

    key = jax.random.PRNGKey(0)
    k1, k2 = jax.random.split(key)

    # Primary check: small NCHW input, Pallas path forced (bypass disabled).
    x = jax.random.uniform(k1, (2, 3, 16, 16), dtype=jnp.float32)
    out = jax.block_until_ready(normalize(x, mean, std, min_pallas_bytes=0))
    assert out.shape == x.shape and out.dtype == x.dtype
    assert jnp.allclose(out, ref(x), rtol=1e-5, atol=1e-6)

    # Same input through the small-input bypass (default threshold).
    out_bypass = jax.block_until_ready(normalize(x, mean, std))
    assert jnp.allclose(out_bypass, ref(x), rtol=1e-5, atol=1e-6)

    # Non-divisible row count (N*C = 12, row_tile = 8): exercises >= 2 row blocks
    # on the parallel axis and a ragged trailing block.
    x2 = jax.random.uniform(k2, (4, 3, 16, 16), dtype=jnp.float32)
    out2 = jax.block_until_ready(normalize(x2, mean, std, min_pallas_bytes=0))
    assert out2.shape == x2.shape and out2.dtype == x2.dtype
    assert jnp.allclose(out2, ref(x2), rtol=1e-5, atol=1e-6)

    print("KERNEL_OK")
</pallas_src>

<mosaic_0001>
module attributes {stable_mosaic.version = 11 : i64} {
  func.func @_normalize_kernel(%arg0: i32, %arg1: memref<6x1xf32, #tpu.memory_space<vmem>>, %arg2: memref<6x1xf32, #tpu.memory_space<vmem>>, %arg3: memref<6x256xf32, #tpu.memory_space<vmem>>, %arg4: memref<6x256xf32, #tpu.memory_space<vmem>>) attributes {dimension_semantics = [#tpu.dimension_semantics<parallel>], iteration_bounds = array<i64: 1>, scalar_prefetch = 0 : i64, scratch_operands = 0 : i64, tpu.core_type = #tpu.core_type<tc>, window_params = [{transform_indices = @transform_0, window_bounds = array<i64: 6, 1>}, {transform_indices = @transform_1, window_bounds = array<i64: 6, 1>}, {transform_indices = @transform_2, window_bounds = array<i64: 6, 256>}, {transform_indices = @transform_3, window_bounds = array<i64: 6, 256>}]} {
    %c0 = arith.constant 0 : index
    %c0_0 = arith.constant 0 : index
    %0 = vector.load %arg3[%c0, %c0_0] : memref<6x256xf32, #tpu.memory_space<vmem>>, vector<6x256xf32>
    %c0_1 = arith.constant 0 : index
    %c0_2 = arith.constant 0 : index
    %1 = vector.load %arg1[%c0_1, %c0_2] : memref<6x1xf32, #tpu.memory_space<vmem>>, vector<6x1xf32>
    %2 = vector.broadcast %1 : vector<6x1xf32> to vector<6x256xf32>
    %3 = arith.subf %0, %2 : vector<6x256xf32>
    %c0_3 = arith.constant 0 : index
    %c0_4 = arith.constant 0 : index
    %4 = vector.load %arg2[%c0_3, %c0_4] : memref<6x1xf32, #tpu.memory_space<vmem>>, vector<6x1xf32>
    %5 = vector.broadcast %4 : vector<6x1xf32> to vector<6x256xf32>
    %6 = arith.mulf %3, %5 : vector<6x256xf32>
    %c0_5 = arith.constant 0 : index
    %c0_6 = arith.constant 0 : index
    %7 = vector.load %arg4[%c0_5, %c0_6] : memref<6x256xf32, #tpu.memory_space<vmem>>, vector<6x256xf32>
    tpu.vector_store %arg4[%c0_5, %c0_6], %6 {strides = array<i32>} : memref<6x256xf32, #tpu.memory_space<vmem>>, vector<6x256xf32>,
    return
  }
  func.func @transform_0(%arg0: i32) -> (i32, i32) {
    %c0_i32 = arith.constant 0 : i32
    %c0_i32_0 = arith.constant 0 : i32
    return %arg0, %c0_i32 : i32, i32
  }
  func.func @transform_1(%arg0: i32) -> (i32, i32) {
    %c0_i32 = arith.constant 0 : i32
    %c0_i32_0 = arith.constant 0 : i32
    return %arg0, %c0_i32 : i32, i32
  }
  func.func @transform_2(%arg0: i32) -> (i32, i32) {
    %c0_i32 = arith.constant 0 : i32
    %c0_i32_0 = arith.constant 0 : i32
    return %arg0, %c0_i32 : i32, i32
  }
  func.func @transform_3(%arg0: i32) -> (i32, i32) {
    %c0_i32 = arith.constant 0 : i32
    %c0_i32_0 = arith.constant 0 : i32
    return %arg0, %c0_i32 : i32, i32
  }
}

</mosaic_0001>

<llo_original>
// kernel: tpu_custom_call.1
$region0: #{tpu_custom_call.1}
  #allocation0 [shape = 'u32[]', space=smem, size = 0x4, offset = 0x4, fixed_abs, tag = 'smem constant byte address 0x4 - core index']
  #allocation1 [shape = 'u32[72,128]{1,0:T(1,128)}', space=vmem, size = 0x9000, scoped, tag = 'internal scratch']
  %s0 = inlined_call_operand.vmem [shape: f32[6,1], index: 0, kind: input, shape index: {}]
  %s1 = inlined_call_operand.vmem [shape: f32[6,1], index: 1, kind: input, shape index: {}]
  %s2 = inlined_call_operand.vmem [shape: f32[6,256], index: 2, kind: input, shape index: {}]
  %s3 = inlined_call_operand.hbm [shape: f32[6,256], index: 3, kind: output, shape index: {}]
  %s4 = sld [smem:[#allocation0]]
  $region22: #{tpu_custom_call.1} parent=0
    _
  %s6 = ssub.s32 1, %s4
  %s7 = scalar_select 0, %s6, %s4
  $region1: #{tpu_custom_call.1} parent=0
    #allocation2 [shape = 'u8[8192]{0}', space=vmem, size = 0x2000, scoped, tag = 'output window, operand 0, single buffered']
    #allocation3 [shape = 's32[1]{0}', space=sflag, size = 0x4, scoped, tag = 'scoped memory for tpu_custom_call.1']
    %8 = vsyncpa [#allocation3], 0
    // Predicated region
    $region2: #{tpu_custom_call.1} parent=1 // pred_check
      _
    $region3: #{tpu_custom_call.1} parent=1 // pred_check_branch
      %10 = sbr.rel (0) target = $region5
    $region4: #{tpu_custom_call.1} parent=1 // pred_region
      _
    $region5: #{tpu_custom_call.1} parent=1 // pred_fallthru
      _
    // Predicated region
    $region6: #{tpu_custom_call.1} parent=1 // pred_check
      _
    $region7: #{tpu_custom_call.1} parent=1 // pred_check_branch
      %12 = sbr.rel (0) target = $region9
    $region8: #{tpu_custom_call.1} parent=1 // pred_region
      _
    $region9: #{tpu_custom_call.1} parent=1 // pred_fallthru
      _
    // Predicated region
    $region10: #{tpu_custom_call.1} parent=1 // pred_check
      _
    $region11: #{tpu_custom_call.1} parent=1 // pred_check_branch
      %14 = sbr.rel (0) target = $region13
    $region12: #{tpu_custom_call.1} parent=1 // pred_region
      _
    $region13: #{tpu_custom_call.1} parent=1 // pred_fallthru
      _
    %v15 = vld [vmem:[%s2] sm:$0x3f]
    %v16 = vld [vmem:[%s2 + $0x8] sm:$0x3f]
    %v17 = vld [vmem:[%s0] sm:$0x3f]
    %19 = vset.pattern.permute.xlu0 0
    %20 = vperm.xlu0 %19, %v17
    %v21 = vpop.permute.xlu0 %20
    %v23 = vsub.f32 %v15, %v21
    %v24 = vsub.f32 %v16, %v21
    %v25 = vld [vmem:[%s1] sm:$0x3f]
    %27 = vset.pattern.permute.xlu0 0
    %28 = vperm.xlu0 %27, %v25
    %v29 = vpop.permute.xlu0 %28
    %v31 = vmul.f32 %v23, %v29
    %v32 = vmul.f32 %v24, %v29
    %33 = vst [vmem:[#allocation2] sm:$0x3f] %v31
    %34 = vst [vmem:[#allocation2 + $0x8] sm:$0x3f] %v32
    // Predicated region
    $region14: #{tpu_custom_call.1} parent=1 // pred_check
      _
    $region15: #{tpu_custom_call.1} parent=1 // pred_check_branch
      %36 = sbr.rel (0) target = $region17
    $region16: #{tpu_custom_call.1} parent=1 // pred_region
      %38 = vsyncadd [#allocation3], 0
      %s40 = sshll.u32 [#allocation2], 4
      %s41 = int_to_ptr.vmem [resolvable:$true] %s40
      %s42 = sshll.u32 %s3, 4
      %s43 = int_to_ptr.hbm [resolvable:$true] %s42
      %45 = dma.vmem_to_hbm [thread:$0]  %s41, 256, %s43, [#allocation3]
    $region17: #{tpu_custom_call.1} parent=1 // pred_fallthru
      _
    // Predicated region
    $region18: #{tpu_custom_call.1} parent=1 // pred_check
      _
    $region19: #{tpu_custom_call.1} parent=1 // pred_check_branch
      %47 = sbr.rel (0) target = $region21
    $region20: #{tpu_custom_call.1} parent=1 // pred_region
      %49 = dma.done [#allocation3], 256
    $region21: #{tpu_custom_call.1} parent=1 // pred_fallthru
      _
    %50 = vsyncpa [#allocation3], 1

</llo_original>
